<compile_context>
chip_gen: v6e
topology: v6e:2x2x1
jax: 0.10.0
libtpu: 0.0.40
codegen_flags: <defaults>
</compile_context>

<pallas_src>
import jax
import jax.numpy as jnp
from jax.experimental import pallas as pl
from jax.experimental.pallas import tpu as pltpu


def _round_up(x, m):
    return ((x + m - 1) // m) * m


# ----------------------------------------------------------------- kernels

def obj_branch_kernel(objs_ref, w1_ref, b1_ref, x_ref):
    # x = objs @ W1 + b1 : (tm, F) @ (F, L) + (1, L) -> (tm, L)
    x = jnp.dot(objs_ref[...], w1_ref[...],
                preferred_element_type=jnp.float32) + b1_ref[...]
    x_ref[...] = x.astype(x_ref.dtype)


def name_branch_kernel(ne_ref, w2_ref, b2_ref, w3_ref, cwt_ref):
    # cwT = ((name_embed @ W2 + b2) * w3)^T : emitted in (L, tn) layout so the
    # hot logits kernel needs no transpose and cwT's lane axis is N.
    # fc3's weight w3 is fused here so the final step is a single matmul.
    c = jnp.dot(ne_ref[...], w2_ref[...],
                preferred_element_type=jnp.float32) + b2_ref[...]   # (tn, L)
    cwt_ref[...] = jnp.transpose(c * w3_ref[...]).astype(cwt_ref.dtype)


def logits_kernel(b3_ref, x_ref, cwt_ref, out_ref):
    # logits tile = x_tile (tm, L) @ cwT[:, j*tn : (j+1)*tn] (L, tn) + b3
    # cwT is the full VMEM-resident (L, N_cw) array; slice the current band.
    tn = out_ref.shape[1]
    start = pl.multiple_of(pl.program_id(1) * tn, tn)
    cw_tile = cwt_ref[:, pl.ds(start, tn)]
    acc = jnp.dot(x_ref[...], cw_tile, preferred_element_type=jnp.float32)
    out_ref[...] = (acc + b3_ref[0, 0]).astype(out_ref.dtype)   # b3 from SMEM


# ----------------------------------------------------------------- wrapper

def name_classifier_forward(objs, w1, b1, name_embed, w2, b2, w3, b3,
                            *, tm=512, tn=1024,
                            intermediate_dtype=jnp.float32,
                            out_dtype=jnp.float32):
    """Forward pass. tm/tn are target B/N tile sizes for large inputs."""
    B, F = objs.shape
    N, G = name_embed.shape
    L = w1.shape[1]

    # Lane-dense tiles: tn multiple of 128 (full-width vst), tm multiple of 8.
    tn = min(tn, _round_up(N, 128))
    tm = min(tm, _round_up(B, 8))
    n_bt = pl.cdiv(B, tm)
    n_nt = pl.cdiv(N, tn)
    # Only the small cwT intermediate is padded (so the in-kernel pl.ds slice
    # is always in-bounds); logits/x keep their exact shapes.
    N_cw = n_nt * tn

    # --- batch branch: x = objs @ W1 + b1 (computed once) ----------------
    x = pl.pallas_call(
        obj_branch_kernel,
        out_shape=jax.ShapeDtypeStruct((B, L), intermediate_dtype),
        grid=(n_bt,),
        in_specs=[
            pl.BlockSpec((tm, F), lambda i: (i, 0)),
            pl.BlockSpec((F, L), lambda i: (0, 0)),
            pl.BlockSpec((1, L), lambda i: (0, 0)),
        ],
        out_specs=pl.BlockSpec((tm, L), lambda i: (i, 0)),
        compiler_params=pltpu.CompilerParams(
            dimension_semantics=("parallel",)),
    )(objs, w1, b1)

    # --- name branch: cwT = ((name_embed @ W2 + b2) * w3)^T (computed once)
    cwt = pl.pallas_call(
        name_branch_kernel,
        out_shape=jax.ShapeDtypeStruct((L, N_cw), intermediate_dtype),
        grid=(n_nt,),
        in_specs=[
            pl.BlockSpec((tn, G), lambda j: (j, 0)),
            pl.BlockSpec((G, L), lambda j: (0, 0)),
            pl.BlockSpec((1, L), lambda j: (0, 0)),
            pl.BlockSpec((1, L), lambda j: (0, 0)),
        ],
        out_specs=pl.BlockSpec((L, tn), lambda j: (0, j)),
        compiler_params=pltpu.CompilerParams(
            dimension_semantics=("parallel",)),
    )(name_embed, w2, b2, w3)

    # --- logits: exact (B, N) output, tiled over (B, N) tiles ------------
    #  * cwT: full-extent block, constant index -> fetched into VMEM once.
    #  * x tile: index depends only on i -> fetched once per row band.
    #  * both axes "parallel" -> v7x megacore sharding when n_bt*n_nt >= 2.
    logits = pl.pallas_call(
        logits_kernel,
        out_shape=jax.ShapeDtypeStruct((B, N), out_dtype),
        grid=(n_bt, n_nt),
        in_specs=[
            pl.BlockSpec(memory_space=pltpu.MemorySpace.SMEM),   # b3 scalar
            pl.BlockSpec((tm, L), lambda i, j: (i, 0)),          # x row band
            pl.BlockSpec((L, N_cw), lambda i, j: (0, 0)),        # cwT resident
        ],
        out_specs=pl.BlockSpec((tm, tn), lambda i, j: (i, j)),
        compiler_params=pltpu.CompilerParams(
            dimension_semantics=("parallel", "parallel")),
    )(b3, x, cwt)

    return logits


def reference_forward(objs, w1, b1, name_embed, w2, b2, w3, b3):
    x = (objs @ w1 + b1)[:, None, :]                 # (B, 1, L)
    c = (name_embed @ w2 + b2)[None, :, :]           # (1, N, L)
    xc = x * c                                       # (B, N, L)
    return jnp.einsum("bnl,l->bn", xc, w3[0]) + b3[0, 0]


def _make_inputs(key, B, feat_dim, latent_dim, num_names, glove_dim):
    keys = jax.random.split(key, 8)
    objs = jax.random.normal(keys[0], (B, feat_dim), dtype=jnp.float32)
    name_embed = jax.random.normal(keys[1], (num_names, glove_dim),
                                   dtype=jnp.float32)
    w1 = jax.random.normal(keys[2], (feat_dim, latent_dim),
                           dtype=jnp.float32) * 0.1
    b1 = jax.random.normal(keys[3], (1, latent_dim), dtype=jnp.float32) * 0.1
    w2 = jax.random.normal(keys[4], (glove_dim, latent_dim),
                           dtype=jnp.float32) * 0.1
    b2 = jax.random.normal(keys[5], (1, latent_dim), dtype=jnp.float32) * 0.1
    w3 = jax.random.normal(keys[6], (1, latent_dim), dtype=jnp.float32) * 0.1
    b3 = jax.random.normal(keys[7], (1, 1), dtype=jnp.float32) * 0.1
    return objs, w1, b1, name_embed, w2, b2, w3, b3


if __name__ == "__main__":
    key = jax.random.PRNGKey(0)
    k_small, k_big = jax.random.split(key, 2)

    # --- small shapes consistent with the module (launch-overhead regime) --
    B, feat_dim, latent_dim, num_names, glove_dim = 2, 32, 32, 8, 16
    args = _make_inputs(k_small, B, feat_dim, latent_dim, num_names, glove_dim)

    logits = name_classifier_forward(*args)
    jax.block_until_ready(logits)
    ref = reference_forward(*args)
    assert logits.shape == (B, num_names)
    assert jnp.allclose(logits, ref, atol=1e-4, rtol=1e-4)

    # --- multi-tile / ragged-edge check (exercises masked edge tiles) ------
    B2, N2 = 300, 260
    args2 = _make_inputs(k_big, B2, feat_dim, latent_dim, N2, glove_dim)
    logits2 = name_classifier_forward(*args2, tm=128, tn=128)
    jax.block_until_ready(logits2)
    ref2 = reference_forward(*args2)
    assert logits2.shape == (B2, N2)
    assert jnp.allclose(logits2, ref2, atol=2e-3, rtol=2e-3)

    print("KERNEL_OK")
</pallas_src>

<mosaic_0001>
module attributes {stable_mosaic.version = 11 : i64} {
  func.func @obj_branch_kernel(%arg0: i32, %arg1: memref<8x32xf32, #tpu.memory_space<vmem>>, %arg2: memref<32x32xf32, #tpu.memory_space<vmem>>, %arg3: memref<1x32xf32, #tpu.memory_space<vmem>>, %arg4: memref<8x32xf32, #tpu.memory_space<vmem>>) attributes {dimension_semantics = [#tpu.dimension_semantics<parallel>], iteration_bounds = array<i64: 1>, scalar_prefetch = 0 : i64, scratch_operands = 0 : i64, tpu.core_type = #tpu.core_type<tc>, window_params = [{transform_indices = @transform_0, window_bounds = array<i64: 8, 32>}, {pipeline_mode = #tpu.pipeline_mode<synchronous>, transform_indices = @transform_1, window_bounds = array<i64: 32, 32>}, {pipeline_mode = #tpu.pipeline_mode<synchronous>, transform_indices = @transform_2, window_bounds = array<i64: 1, 32>}, {transform_indices = @transform_3, window_bounds = array<i64: 8, 32>}]} {
    %c0 = arith.constant 0 : index
    %c0_0 = arith.constant 0 : index
    %0 = vector.load %arg1[%c0, %c0_0] : memref<8x32xf32, #tpu.memory_space<vmem>>, vector<8x32xf32>
    %c0_1 = arith.constant 0 : index
    %c0_2 = arith.constant 0 : index
    %1 = vector.load %arg2[%c0_1, %c0_2] : memref<32x32xf32, #tpu.memory_space<vmem>>, vector<32x32xf32>
    %cst = arith.constant dense<0.000000e+00> : vector<8x32xf32>
    %2 = tpu.matmul %0, %1, %cst {dimension_numbers = #tpu.dot_dimension_numbers<[1], [0], [0], [1], [0, 0, 1, 1], [], []>} : vector<8x32xf32>, vector<32x32xf32>, vector<8x32xf32> -> vector<8x32xf32>
    %c0_3 = arith.constant 0 : index
    %c0_4 = arith.constant 0 : index
    %3 = vector.load %arg3[%c0_3, %c0_4] : memref<1x32xf32, #tpu.memory_space<vmem>>, vector<1x32xf32>
    %4 = vector.broadcast %3 : vector<1x32xf32> to vector<8x32xf32>
    %5 = arith.addf %2, %4 : vector<8x32xf32>
    %c0_5 = arith.constant 0 : index
    %c0_6 = arith.constant 0 : index
    %6 = vector.load %arg4[%c0_5, %c0_6] : memref<8x32xf32, #tpu.memory_space<vmem>>, vector<8x32xf32>
    tpu.vector_store %arg4[%c0_5, %c0_6], %5 {strides = array<i32>} : memref<8x32xf32, #tpu.memory_space<vmem>>, vector<8x32xf32>,
    return
  }
  func.func @transform_0(%arg0: i32) -> (i32, i32) {
    %c0_i32 = arith.constant 0 : i32
    %c0_i32_0 = arith.constant 0 : i32
    return %arg0, %c0_i32 : i32, i32
  }
  func.func @transform_1(%arg0: i32) -> (i32, i32) {
    %c0_i32 = arith.constant 0 : i32
    %c0_i32_0 = arith.constant 0 : i32
    %c0_i32_1 = arith.constant 0 : i32
    return %c0_i32, %c0_i32_0 : i32, i32
  }
  func.func @transform_2(%arg0: i32) -> (i32, i32) {
    %c0_i32 = arith.constant 0 : i32
    %c0_i32_0 = arith.constant 0 : i32
    %c0_i32_1 = arith.constant 0 : i32
    return %c0_i32, %c0_i32_0 : i32, i32
  }
  func.func @transform_3(%arg0: i32) -> (i32, i32) {
    %c0_i32 = arith.constant 0 : i32
    %c0_i32_0 = arith.constant 0 : i32
    return %arg0, %c0_i32 : i32, i32
  }
}

</mosaic_0001>

<llo_original>
// kernel: tpu_custom_call.1
$region0: #{tpu_custom_call.1}
  #allocation0 [shape = 'u32[]', space=smem, size = 0x4, offset = 0x4, fixed_abs, tag = 'smem constant byte address 0x4 - core index']
  #allocation1 [shape = 'u32[144,128]{1,0:T(1,128)}', space=vmem, size = 0x12000, scoped, tag = 'internal scratch']
  %s0 = inlined_call_operand.hbm [shape: f32[2,32], index: 0, kind: input, shape index: {}]
  %s1 = inlined_call_operand.hbm [shape: f32[32,32], index: 1, kind: input, shape index: {}]
  %s2 = inlined_call_operand.vmem [shape: f32[1,32], index: 2, kind: input, shape index: {}]
  %s3 = inlined_call_operand.hbm [shape: f32[2,32], index: 3, kind: output, shape index: {}]
  %s4 = sld [smem:[#allocation0]]
  $region30: #{tpu_custom_call.1} parent=0
    _
  %s6 = ssub.s32 1, %s4
  %s7 = scalar_select 0, %s6, %s4
  $region1: #{tpu_custom_call.1} parent=0
    #allocation2 [shape = 'u8[4096]{0}', space=vmem, size = 0x1000, scoped, tag = 'input window, operand 0, single buffered']
    #allocation3 [shape = 's32[1]{0}', space=sflag, size = 0x4, scoped, tag = 'scoped memory for tpu_custom_call.1']
    #allocation4 [shape = 's32[1]{0}', space=sflag, size = 0x4, scoped, tag = 'scoped memory for tpu_custom_call.1']
    #allocation5 [shape = 'u8[16384]{0}', space=vmem, size = 0x4000, scoped, tag = 'input window, operand 1, single buffered']
    #allocation6 [shape = 's32[1]{0}', space=sflag, size = 0x4, scoped, tag = 'scoped memory for tpu_custom_call.1']
    #allocation7 [shape = 'u8[4096]{0}', space=vmem, size = 0x1000, scoped, tag = 'output window, operand 0, single buffered']
    %8 = vsyncpa [#allocation3], 0
    %9 = vsyncpa [#allocation6], 0
    %10 = vsyncpa [#allocation4], 0
    // Predicated region
    $region2: #{tpu_custom_call.1} parent=1 // pred_check
      _
    $region3: #{tpu_custom_call.1} parent=1 // pred_check_branch
      %12 = sbr.rel (0) target = $region5
    $region4: #{tpu_custom_call.1} parent=1 // pred_region
      %s14 = ssub.s32 128, 32
      %15 = vsyncadd [#allocation3], %s14
      %s16 = sshll.u32 [#allocation2], 4
      %s17 = int_to_ptr.vmem [resolvable:$true] %s16
      %22 = dma.hbm_to_vmem [thread:$0]  %s0, 32, %s17, [#allocation3], 32, 32, 2
    $region5: #{tpu_custom_call.1} parent=1 // pred_fallthru
      _
    // Predicated region
    $region6: #{tpu_custom_call.1} parent=1 // pred_check
      _
    $region7: #{tpu_custom_call.1} parent=1 // pred_check_branch
      %24 = sbr.rel (0) target = $region9
    $region8: #{tpu_custom_call.1} parent=1 // pred_region
      %s26 = ssub.s32 512, 512
      %27 = vsyncadd [#allocation6], %s26
      %s28 = sshll.u32 [#allocation5], 4
      %s29 = int_to_ptr.vmem [resolvable:$true] %s28
      %34 = dma.hbm_to_vmem [thread:$0]  %s1, 512, %s29, [#allocation6], 128, 128, 8
    $region9: #{tpu_custom_call.1} parent=1 // pred_fallthru
      _
    // Predicated region
    $region10: #{tpu_custom_call.1} parent=1 // pred_check
      _
    $region11: #{tpu_custom_call.1} parent=1 // pred_check_branch
      %36 = sbr.rel (0) target = $region13
    $region12: #{tpu_custom_call.1} parent=1 // pred_region
      _
    $region13: #{tpu_custom_call.1} parent=1 // pred_fallthru
      _
    // Predicated region
    $region14: #{tpu_custom_call.1} parent=1 // pred_check
      _
    $region15: #{tpu_custom_call.1} parent=1 // pred_check_branch
      %38 = sbr.rel (0) target = $region17
    $region16: #{tpu_custom_call.1} parent=1 // pred_region
      %39 = dma.done [#allocation3], 128
    $region17: #{tpu_custom_call.1} parent=1 // pred_fallthru
      _
    // Predicated region
    $region18: #{tpu_custom_call.1} parent=1 // pred_check
      _
    $region19: #{tpu_custom_call.1} parent=1 // pred_check_branch
      %41 = sbr.rel (0) target = $region21
    $region20: #{tpu_custom_call.1} parent=1 // pred_region
      %42 = dma.done [#allocation6], 512
    $region21: #{tpu_custom_call.1} parent=1 // pred_fallthru
      _
    %v43 = vld [vmem:[#allocation2] sm:$0xff]
    %v44 = vld [vmem:[#allocation5] sm:$0xff]
    %v45 = vld [vmem:[#allocation5 + $0x8] sm:$0xff]
    %v46 = vld [vmem:[#allocation5 + $0x10] sm:$0xff]
    %v47 = vld [vmem:[#allocation5 + $0x18] sm:$0xff]
    %v48 = vld [vmem:[%s2] sm:$0x1]
    %v50 = vlaneseq
    %v51 = vshrl.u32 %v50, 7
    %v52 = vsub.s32 0, %v51
    %v53 = vrot.slane %v48, %v52
    %vm55 = vcmask 261120
    %v57 = vsel %vm55, %v43, 0
    %59 = vmatprep.subr.mxu0 0.0
    %60 = vmatpush1.msra.mxu0 0.0
    %61 = vmatprep.subr.mxu0 0.0
    %62 = vmatpush1.msra.mxu0 0.0
    %63 = vmatprep.subr.mxu0 0.0
    %64 = vmatpush1.msra.mxu0 0.0
    %65 = vmatprep.subr.mxu0 0.0
    %66 = vmatpush1.msra.mxu0 0.0
    %67 = vmatprep.subr.mxu0 0.0
    %68 = vmatpush1.msra.mxu0 0.0
    %69 = vmatprep.subr.mxu0 0.0
    %70 = vmatpush1.msra.mxu0 0.0
    %71 = vmatprep.subr.mxu0 0.0
    %72 = vmatpush1.msra.mxu0 0.0
    %73 = vmatprep.subr.mxu0 0.0
    %74 = vmatpush1.msra.mxu0 0.0
    %75 = vmatprep.subr.mxu0 0.0
    %76 = vmatpush1.msra.mxu0 0.0
    %77 = vmatprep.subr.mxu0 0.0
    %78 = vmatpush1.msra.mxu0 0.0
    %79 = vmatprep.subr.mxu0 0.0
    %80 = vmatpush1.msra.mxu0 0.0
    %81 = vmatprep.subr.mxu0 0.0
    %82 = vmatpush1.msra.mxu0 0.0
    %83 = vmatprep.subr.mxu0 0.0
    %84 = vmatpush1.msra.mxu0 %v47
    %85 = vmatprep.subr.mxu0 0.0
    %86 = vmatpush1.msra.mxu0 %v46
    %87 = vmatprep.subr.mxu0 0.0
    %88 = vmatpush1.msra.mxu0 %v45
    %89 = vmatprep.subr.mxu0 0.0
    %90 = vmatpush1.msra.mxu0 %v44
    %91 = vmatprep.subr.mxu0 0.0
    %92 = vmatpush2.msra.mxu0 0.0
    %93 = vmatprep.subr.mxu0 0.0
    %94 = vmatpush2.msra.mxu0 0.0
    %95 = vmatprep.subr.mxu0 0.0
    %96 = vmatpush2.msra.mxu0 0.0
    %97 = vmatprep.subr.mxu0 0.0
    %98 = vmatpush2.msra.mxu0 0.0
    %99 = vmatprep.subr.mxu0 0.0
    %100 = vmatpush2.msra.mxu0 0.0
    %101 = vmatprep.subr.mxu0 0.0
    %102 = vmatpush2.msra.mxu0 0.0
    %103 = vmatprep.subr.mxu0 0.0
    %104 = vmatpush2.msra.mxu0 0.0
    %105 = vmatprep.subr.mxu0 0.0
    %106 = vmatpush2.msra.mxu0 0.0
    %107 = vmatprep.subr.mxu0 0.0
    %108 = vmatpush2.msra.mxu0 0.0
    %109 = vmatprep.subr.mxu0 0.0
    %110 = vmatpush2.msra.mxu0 0.0
    %111 = vmatprep.subr.mxu0 0.0
    %112 = vmatpush2.msra.mxu0 0.0
    %113 = vmatprep.subr.mxu0 0.0
    %114 = vmatpush2.msra.mxu0 0.0
    %115 = vmatprep.subr.mxu0 0.0
    %116 = vmatpush2.msra.mxu0 0.0
    %117 = vmatprep.subr.mxu0 0.0
    %118 = vmatpush2.msra.mxu0 0.0
    %119 = vmatprep.subr.mxu0 0.0
    %120 = vmatpush2.msra.mxu0 0.0
    %121 = vmatprep.subr.mxu0 0.0
    %122 = vmatpush2.msra.mxu0 0.0
    %123 = vmatprep.mubr.f32.mxu0 0.0
    %124 = vmatmul.mubr.f32.gmra.mxu0 %v57
    %v125 = vpop.f32.mrf.mxu0
    %v126 = vadd.f32 %v53, %v125
    %v127 = vpop.f32.mrf.mxu0
    %128 = vdwg.mxu0
    %129 = vst.msk [vmem:[#allocation7] sm:$0xff] %vm55, %v126
    // Predicated region
    $region22: #{tpu_custom_call.1} parent=1 // pred_check
      _
    $region23: #{tpu_custom_call.1} parent=1 // pred_check_branch
      %131 = sbr.rel (0) target = $region25
    $region24: #{tpu_custom_call.1} parent=1 // pred_region
      %s133 = ssub.s32 128, 32
      %134 = vsyncadd [#allocation4], %s133
      %s135 = sshll.u32 [#allocation7], 4
      %s136 = int_to_ptr.vmem [resolvable:$true] %s135
      %141 = dma.vmem_to_hbm [thread:$0]  %s136, 32, %s3, [#allocation4], 32, 32, 2
    $region25: #{tpu_custom_call.1} parent=1 // pred_fallthru
      _
    // Predicated region
    $region26: #{tpu_custom_call.1} parent=1 // pred_check
      _
    $region27: #{tpu_custom_call.1} parent=1 // pred_check_branch
      %143 = sbr.rel (0) target = $region29
    $region28: #{tpu_custom_call.1} parent=1 // pred_region
      %144 = dma.done [#allocation4], 128
    $region29: #{tpu_custom_call.1} parent=1 // pred_fallthru
      _
    %145 = vsyncpa [#allocation3], 1
    %146 = vsyncpa [#allocation6], 1
    %147 = vsyncpa [#allocation4], 1

</llo_original>
